<compile_context>
chip_gen: v6e
topology: v6e:2x2x1
jax: 0.10.0
libtpu: 0.0.40
codegen_flags: <defaults>
</compile_context>

<pallas_src>
import jax
import jax.numpy as jnp
from jax.experimental import pallas as pl
from jax.experimental.pallas import tpu as pltpu

BATCH = 2
SEQ_LEN = 8      # context length implied by the surrounding GPT config
EMB_DIM = 32

LANES = 128
MAX_LANE_WIDTH = 512              # widest lane-dense last dim we flatten to
MAX_TILE_BYTES = 2 * 1024 * 1024  # per-buffer tile cap (v7x: 32 MiB scoped VMEM)
SMALL_BYTES = 4 * 1024 * 1024     # below this: single grid-less invocation


def identity_kernel(x_ref, o_ref):
    # One full-width vector load + store of the current VMEM-resident block.
    o_ref[...] = x_ref[...]


def _flatten_lane_dense(x):
    """Present x as a lane-dense 2-D slab (rows, cols)."""
    total = x.size
    if total % LANES == 0:
        lane_w = LANES
        while lane_w < MAX_LANE_WIDTH and total % (lane_w * 2) == 0:
            lane_w *= 2
        return x.reshape(total // lane_w, lane_w)
    # Odd total: keep the original last dim instead of a 1-row layout so the
    # store stays as lane-dense as the data allows.
    # TODO(synk): pad the last dim up to a multiple of 128 for fully unmasked
    # vst stores on v5e (single vst slot) when odd shapes actually occur.
    last = x.shape[-1] if x.ndim >= 1 else 1
    return x.reshape(-1, last)


def _pick_block_rows(rows, bytes_per_row):
    """Largest candidate row-tile (multiple of 8) dividing `rows` and fitting
    MAX_TILE_BYTES.  Returns None if no candidate works."""
    limit = max(8, MAX_TILE_BYTES // max(bytes_per_row, 1))
    for cand in (4096, 2048, 1024, 512, 256, 128, 64, 32, 16, 8):
        if cand <= limit and cand <= rows and rows % cand == 0:
            return cand
    return None


def dummy_transformer_block(x):
    """Pallas implementation of DummyTransformerBlock.forward (identity)."""
    orig_shape = x.shape
    x2d = _flatten_lane_dense(x)
    rows, cols = x2d.shape
    itemsize = jnp.dtype(x2d.dtype).itemsize
    nbytes = rows * cols * itemsize

    if nbytes <= SMALL_BYTES:
        # Tiny input: whole array VMEM-resident, no grid, zero per-step
        # overhead.  Output aliases the input buffer.
        out2d = pl.pallas_call(
            identity_kernel,
            out_shape=jax.ShapeDtypeStruct(x2d.shape, x2d.dtype),
            in_specs=[pl.BlockSpec(memory_space=pltpu.MemorySpace.VMEM)],
            out_specs=pl.BlockSpec(memory_space=pltpu.MemorySpace.VMEM),
            input_output_aliases={0: 0},
        )(x2d)
        return out2d.reshape(orig_shape)

    # Large input: tiled, pipelined copy so we never exceed scoped VMEM
    # (16 MiB v5e / 32 MiB v6e-v7x).  Row axis is embarrassingly parallel.
    block_rows = _pick_block_rows(rows, cols * itemsize)
    if block_rows is None:
        # No clean row tiling (ragged row count): fall back to a single
        # invocation with an explicitly raised VMEM budget.
        out2d = pl.pallas_call(
            identity_kernel,
            out_shape=jax.ShapeDtypeStruct(x2d.shape, x2d.dtype),
            in_specs=[pl.BlockSpec(memory_space=pltpu.MemorySpace.VMEM)],
            out_specs=pl.BlockSpec(memory_space=pltpu.MemorySpace.VMEM),
            input_output_aliases={0: 0},
            compiler_params=pltpu.CompilerParams(
                vmem_limit_bytes=min(2 * nbytes + (1 << 20), 100 << 20)),
        )(x2d)
        return out2d.reshape(orig_shape)

    out2d = pl.pallas_call(
        identity_kernel,
        out_shape=jax.ShapeDtypeStruct((rows, cols), x2d.dtype),
        grid=(rows // block_rows,),
        in_specs=[pl.BlockSpec((block_rows, cols), lambda i: (i, 0))],
        out_specs=pl.BlockSpec((block_rows, cols), lambda i: (i, 0)),
        input_output_aliases={0: 0},
        compiler_params=pltpu.CompilerParams(
            dimension_semantics=("parallel",)),
    )(x2d)
    return out2d.reshape(orig_shape)


if __name__ == "__main__":
    key = jax.random.PRNGKey(0)
    x = jax.random.normal(key, (BATCH, SEQ_LEN, EMB_DIM), jnp.float32)

    out = dummy_transformer_block(x)
    out = jax.block_until_ready(out)

    assert out.shape == x.shape
    assert out.dtype == x.dtype
    # Forward of DummyTransformerBlock is exactly `return x`.
    assert jnp.array_equal(out, x), "DummyTransformerBlock must be the identity"
    print("KERNEL_OK")
</pallas_src>

<mosaic_0001>
module attributes {stable_mosaic.version = 11 : i64} {
  func.func @identity_kernel(%arg0: memref<1x512xf32, #tpu.memory_space<vmem>>, %arg1: memref<1x512xf32, #tpu.memory_space<vmem>>) attributes {dimension_semantics = [], scalar_prefetch = 0 : i64, scratch_operands = 0 : i64, tpu.core_type = #tpu.core_type<tc>} {
    %c0 = arith.constant 0 : index
    %c0_0 = arith.constant 0 : index
    %0 = vector.load %arg0[%c0, %c0_0] : memref<1x512xf32, #tpu.memory_space<vmem>>, vector<1x512xf32>
    %c0_1 = arith.constant 0 : index
    %c0_2 = arith.constant 0 : index
    %1 = vector.load %arg1[%c0_1, %c0_2] : memref<1x512xf32, #tpu.memory_space<vmem>>, vector<1x512xf32>
    tpu.vector_store %arg1[%c0_1, %c0_2], %0 {strides = array<i32>} : memref<1x512xf32, #tpu.memory_space<vmem>>, vector<1x512xf32>,
    return
  }
}

</mosaic_0001>

<llo_original>
// kernel: tpu_custom_call.1
$region0: #{tpu_custom_call.1}
  #allocation0 [shape = 'u32[]', space=smem, size = 0x4, offset = 0x4, fixed_abs, tag = 'smem constant byte address 0x4 - core index']
  #allocation1 [shape = 'u32[144,128]{1,0:T(1,128)}', space=vmem, size = 0x12000, scoped, tag = 'internal scratch']
  %s0 = inlined_call_operand.hbm [shape: f32[1,512], index: 0, kind: input, shape index: {}, may-alias: {0,1}]
  %s1 = inlined_call_operand.hbm [shape: f32[1,512], index: 1, kind: output, shape index: {}, may-alias: {0,1}]
  %s2 = sld [smem:[#allocation0]]
  $region18: #{tpu_custom_call.1} parent=0
    _
  %s4 = ssub.s32 1, %s2
  %s5 = scalar_select 0, %s4, %s2
  $region1: #{tpu_custom_call.1} parent=0
    #allocation2 [shape = 'u8[2048]{0}', space=vmem, size = 0x800, scoped, tag = 'input window, operand 0, single buffered']
    #allocation3 [shape = 's32[1]{0}', space=sflag, size = 0x4, scoped, tag = 'scoped memory for tpu_custom_call.1']
    #allocation4 [shape = 's32[1]{0}', space=sflag, size = 0x4, scoped, tag = 'scoped memory for tpu_custom_call.1']
    #allocation5 [shape = 'u8[2048]{0}', space=vmem, size = 0x800, scoped, tag = 'output window, operand 0, single buffered']
    %6 = vsyncpa [#allocation3], 0
    %7 = vsyncpa [#allocation4], 0
    // Predicated region
    $region2: #{tpu_custom_call.1} parent=1 // pred_check
      _
    $region3: #{tpu_custom_call.1} parent=1 // pred_check_branch
      %9 = sbr.rel (0) target = $region5
    $region4: #{tpu_custom_call.1} parent=1 // pred_region
      %s11 = ssub.s32 64, 64
      %12 = vsyncadd [#allocation3], %s11
      %s14 = sshll.u32 [#allocation2], 4
      %s15 = int_to_ptr.vmem [resolvable:$true] %s14
      %17 = dma.hbm_to_vmem [thread:$0]  %s0, 64, %s15, [#allocation3]
    $region5: #{tpu_custom_call.1} parent=1 // pred_fallthru
      _
    // Predicated region
    $region6: #{tpu_custom_call.1} parent=1 // pred_check
      _
    $region7: #{tpu_custom_call.1} parent=1 // pred_check_branch
      %19 = sbr.rel (0) target = $region9
    $region8: #{tpu_custom_call.1} parent=1 // pred_region
      %20 = dma.done [#allocation3], 64
    $region9: #{tpu_custom_call.1} parent=1 // pred_fallthru
      _
    %v21 = vld [vmem:[#allocation2] sm:$0xf]
    %v22 = vlaneseq
    %vm23 = vcmp.ge.s32.totalorder %v22, 0
    %vm24 = vcmp.lt.s32.totalorder %v22, 512
    %vm25 = vmand %vm23, %vm24
    %26 = vst.msk [vmem:[#allocation5] sm:$0xf] %vm25, %v21
    // Predicated region
    $region10: #{tpu_custom_call.1} parent=1 // pred_check
      _
    $region11: #{tpu_custom_call.1} parent=1 // pred_check_branch
      %28 = sbr.rel (0) target = $region13
    $region12: #{tpu_custom_call.1} parent=1 // pred_region
      %s30 = ssub.s32 64, 64
      %31 = vsyncadd [#allocation4], %s30
      %s33 = sshll.u32 [#allocation5], 4
      %s34 = int_to_ptr.vmem [resolvable:$true] %s33
      %36 = dma.vmem_to_hbm [thread:$0]  %s34, 64, %s1, [#allocation4]
    $region13: #{tpu_custom_call.1} parent=1 // pred_fallthru
      _
    // Predicated region
    $region14: #{tpu_custom_call.1} parent=1 // pred_check
      _
    $region15: #{tpu_custom_call.1} parent=1 // pred_check_branch
      %38 = sbr.rel (0) target = $region17
    $region16: #{tpu_custom_call.1} parent=1 // pred_region
      %39 = dma.done [#allocation4], 64
    $region17: #{tpu_custom_call.1} parent=1 // pred_fallthru
      _
    %40 = vsyncpa [#allocation3], 1
    %41 = vsyncpa [#allocation4], 1

</llo_original>
